<compile_context>
chip_gen: v5e
topology: v5e:2x2
jax: 0.10.0
libtpu: 0.0.40
codegen_flags: <defaults>
</compile_context>

<pallas_src>
import numpy as np
import jax
import jax.numpy as jnp
from jax import lax
from jax.experimental import pallas as pl
from jax.experimental.pallas import tpu as pltpu

_TILE_P_MAX = 4096   # lane-tile over the spatial axis; safe for v7x 64 MiB VMEM
_N_CHUNK_MAX = 32    # particle sublane-chunk processed per inner-loop step


def _make_vorticity_kernel(nc, n_chunks, tile_p):
    """Build the kernel for a fixed particle-chunk size / chunk count / P tile."""

    def kernel(pts_ref, feat_ref, out_ref):
        # pts_ref:  (1, 2, tile_p)     points, P on lanes
        # feat_ref: (1, 4, n_pad, 1)   [y, x, coeff, -1/sig^2] particle columns
        # out_ref:  (1, 1, tile_p)
        py = pts_ref[0, 0:1, :]                      # (1, tile_p)
        px = pts_ref[0, 1:2, :]                      # (1, tile_p)

        def chunk_sum(start):
            yc = feat_ref[0, 0, pl.ds(start, nc), :]       # (nc, 1)
            xc = feat_ref[0, 1, pl.ds(start, nc), :]       # (nc, 1)
            coeff = feat_ref[0, 2, pl.ds(start, nc), :]    # (nc, 1)
            nis2 = feat_ref[0, 3, pl.ds(start, nc), :]     # (nc, 1)
            dy = py - yc                                   # (nc, tile_p)
            dx = px - xc                                   # (nc, tile_p)
            sq = dy * dy + dx * dx                         # (nc, tile_p)
            # single EUP op per element; tau & both divides folded into coeff/nis2
            contrib = coeff * jnp.exp(sq * nis2)           # (nc, tile_p)
            return jnp.sum(contrib, axis=0, keepdims=True)  # (1, tile_p)

        if n_chunks == 1:
            acc = chunk_sum(0)
        else:
            def body(c, acc):
                start = pl.multiple_of(c * nc, nc)         # sublane-aligned start
                return acc + chunk_sum(start)

            acc = lax.fori_loop(0, n_chunks, body,
                                jnp.zeros((1, tile_p), jnp.float32),
                                unroll=n_chunks <= 8)

        out_ref[0, :, :] = acc

    return kernel


def _gaussian_falloff_kernel_vorticity(vortex_feature, points):
    vortex_feature = jnp.asarray(vortex_feature, jnp.float32)
    points = jnp.asarray(points, jnp.float32)

    B, N, _ = vortex_feature.shape
    spatial = points.shape[1:-1]
    P = int(np.prod(spatial))

    # ---- per-particle precompute: hoist both divides out of the (N, P) loop ----
    y = vortex_feature[..., 0]
    x = vortex_feature[..., 1]
    tau = vortex_feature[..., 2]
    sig = vortex_feature[..., 3]
    sig2 = sig * sig
    coeff = tau / (np.pi * sig2)                 # tau / (pi * sig^2)
    neg_inv_sig2 = -1.0 / sig2                   # -1 / sig^2

    # particle axis padded to a multiple of the in-kernel chunk size; padded
    # particles get coeff = 0, neg_inv_sig2 = 0 -> contribute exactly 0, no NaNs.
    n_pad8 = max(8, ((N + 7) // 8) * 8)
    nc = min(n_pad8, _N_CHUNK_MAX)
    n_pad = ((n_pad8 + nc - 1) // nc) * nc
    n_chunks = n_pad // nc

    feat = jnp.stack([y, x, coeff, neg_inv_sig2], axis=1)        # (B, 4, N)
    if n_pad != N:
        feat = jnp.pad(feat, ((0, 0), (0, 0), (0, n_pad - N)))
    feat_t = feat[..., None]                                     # (B, 4, n_pad, 1)

    # ---- point layout: (B, 2, P) with P on lanes, tiled over a parallel P axis ----
    p128 = max(128, ((P + 127) // 128) * 128)
    tile_p = min(p128, _TILE_P_MAX)
    p_pad = ((p128 + tile_p - 1) // tile_p) * tile_p
    n_ptiles = p_pad // tile_p

    pts_t = jnp.transpose(points.reshape(B, P, 2), (0, 2, 1))    # (B, 2, P)
    if p_pad != P:
        pts_t = jnp.pad(pts_t, ((0, 0), (0, 0), (0, p_pad - P)))

    out = pl.pallas_call(
        _make_vorticity_kernel(nc, n_chunks, tile_p),
        out_shape=jax.ShapeDtypeStruct((B, 1, p_pad), jnp.float32),
        grid_spec=pltpu.PrefetchScalarGridSpec(
            num_scalar_prefetch=0,
            grid=(B, n_ptiles),
            in_specs=[
                pl.BlockSpec((1, 2, tile_p), lambda b, p: (b, 0, p)),
                pl.BlockSpec((1, 4, n_pad, 1), lambda b, p: (b, 0, 0, 0)),
            ],
            out_specs=pl.BlockSpec((1, 1, tile_p), lambda b, p: (b, 0, p)),
        ),
        compiler_params=pltpu.CompilerParams(
            dimension_semantics=("parallel", "parallel"),
            vmem_limit_bytes=32 * 1024 * 1024,
        ),
    )(pts_t, feat_t)

    out = out[:, 0, :P]
    return out.reshape((B,) + tuple(spatial) + (1,))


# jit the wrapper so reshape/transpose/pad of points fuse into a single pass.
gaussian_falloff_kernel_vorticity = jax.jit(_gaussian_falloff_kernel_vorticity)


def _reference(vortex_feature, points):
    # Pure-JAX transcription of the PyTorch forward (for validation only).
    y, x, tau, sig = [vortex_feature[..., i] for i in range(4)]
    B = vortex_feature.shape[0]
    loc = jnp.stack([y, x], axis=-1).reshape(B, -1, 2)
    tau = tau.reshape(B, -1)
    sigma = sig.reshape(B, -1, 1)
    pts = points[..., None, :]                                    # (B, H, W, 1, 2)
    src_loc = loc[:, None, None, :, :]                            # (B, 1, 1, N, 2)
    src_strength = tau[..., None][:, None, None, :, :]            # (B, 1, 1, N, 1)
    src_sigma = sigma[:, None, None, :, :]                        # (B, 1, 1, N, 1)
    dist = pts - src_loc
    sq = jnp.sum(dist ** 2, axis=-1, keepdims=True)
    falloff = jnp.exp(-sq / src_sigma ** 2) / (np.pi * src_sigma ** 2)
    strength = src_strength * falloff
    return jnp.sum(strength, axis=-2)


def _make_inputs(key, B, N, H, W):
    k1, k2, k3 = jax.random.split(key, 3)
    yx = jax.random.uniform(k1, (B, N, 2), jnp.float32, 0.0, float(max(H, W)))
    tau = jax.random.normal(k2, (B, N, 1), dtype=jnp.float32)
    sig = jax.random.uniform(k3, (B, N, 1), jnp.float32, 0.5, 2.0)
    vortex_feature = jnp.concatenate([yx, tau, sig], axis=-1)     # (B, N, 4)
    gy, gx = jnp.meshgrid(jnp.arange(H, dtype=jnp.float32) + 0.5,
                          jnp.arange(W, dtype=jnp.float32) + 0.5, indexing="ij")
    points = jnp.broadcast_to(jnp.stack([gy, gx], axis=-1), (B, H, W, 2))
    return vortex_feature, points


if __name__ == "__main__":
    # Module has no learnable parameters (__init__ is empty) — nothing to initialize.
    key = jax.random.PRNGKey(0)
    k_a, k_b = jax.random.split(key)

    # Case 1: small (single particle chunk, single P tile)
    # Case 2: larger N & non-multiple-of-128 P (chunked particle loop + lane padding)
    for kk, (B, N, H, W) in ((k_a, (2, 8, 16, 16)), (k_b, (2, 80, 24, 20))):
        vortex_feature, points = _make_inputs(kk, B, N, H, W)
        out = gaussian_falloff_kernel_vorticity(vortex_feature, points)
        out = jax.block_until_ready(out)
        ref = _reference(vortex_feature, points)
        assert out.shape == ref.shape == (B, H, W, 1), (out.shape, ref.shape)
        np.testing.assert_allclose(np.asarray(out), np.asarray(ref),
                                   rtol=1e-4, atol=2e-5)

    print("KERNEL_OK")
</pallas_src>

<mosaic_0001>
module attributes {stable_mosaic.version = 11 : i64} {
  func.func @kernel(%arg0: i32, %arg1: i32, %arg2: memref<1x2x256xf32, #tpu.memory_space<vmem>>, %arg3: memref<1x4x8x1xf32, #tpu.memory_space<vmem>>, %arg4: memref<1x1x256xf32, #tpu.memory_space<vmem>>) attributes {dimension_semantics = [#tpu.dimension_semantics<parallel>, #tpu.dimension_semantics<parallel>], iteration_bounds = array<i64: 2, 1>, scalar_prefetch = 0 : i64, scratch_operands = 0 : i64, tpu.core_type = #tpu.core_type<tc>, window_params = [{transform_indices = @transform_0, window_bounds = array<i64: 1, 2, 256>}, {transform_indices = @transform_1, window_bounds = array<i64: 1, 4, 8, 1>}, {transform_indices = @transform_2, window_bounds = array<i64: 1, 1, 256>}]} {
    %c0 = arith.constant 0 : index
    %c0_0 = arith.constant 0 : index
    %c0_1 = arith.constant 0 : index
    %0 = vector.load %arg2[%c0, %c0_0, %c0_1] : memref<1x2x256xf32, #tpu.memory_space<vmem>>, vector<1x1x256xf32>
    %1 = vector.shape_cast %0 : vector<1x1x256xf32> to vector<1x256xf32>
    %c0_2 = arith.constant 0 : index
    %c1 = arith.constant 1 : index
    %c0_3 = arith.constant 0 : index
    %2 = vector.load %arg2[%c0_2, %c1, %c0_3] : memref<1x2x256xf32, #tpu.memory_space<vmem>>, vector<1x1x256xf32>
    %3 = vector.shape_cast %2 : vector<1x1x256xf32> to vector<1x256xf32>
    %c0_4 = arith.constant 0 : index
    %c0_5 = arith.constant 0 : index
    %c0_6 = arith.constant 0 : index
    %c0_7 = arith.constant 0 : index
    %4 = vector.load %arg3[%c0_4, %c0_5, %c0_6, %c0_7] : memref<1x4x8x1xf32, #tpu.memory_space<vmem>>, vector<1x1x8x1xf32>
    %5 = vector.shape_cast %4 : vector<1x1x8x1xf32> to vector<8x1xf32>
    %c0_8 = arith.constant 0 : index
    %c1_9 = arith.constant 1 : index
    %c0_10 = arith.constant 0 : index
    %c0_11 = arith.constant 0 : index
    %6 = vector.load %arg3[%c0_8, %c1_9, %c0_10, %c0_11] : memref<1x4x8x1xf32, #tpu.memory_space<vmem>>, vector<1x1x8x1xf32>
    %7 = vector.shape_cast %6 : vector<1x1x8x1xf32> to vector<8x1xf32>
    %c0_12 = arith.constant 0 : index
    %c2 = arith.constant 2 : index
    %c0_13 = arith.constant 0 : index
    %c0_14 = arith.constant 0 : index
    %8 = vector.load %arg3[%c0_12, %c2, %c0_13, %c0_14] : memref<1x4x8x1xf32, #tpu.memory_space<vmem>>, vector<1x1x8x1xf32>
    %9 = vector.shape_cast %8 : vector<1x1x8x1xf32> to vector<8x1xf32>
    %c0_15 = arith.constant 0 : index
    %c3 = arith.constant 3 : index
    %c0_16 = arith.constant 0 : index
    %c0_17 = arith.constant 0 : index
    %10 = vector.load %arg3[%c0_15, %c3, %c0_16, %c0_17] : memref<1x4x8x1xf32, #tpu.memory_space<vmem>>, vector<1x1x8x1xf32>
    %11 = vector.shape_cast %10 : vector<1x1x8x1xf32> to vector<8x1xf32>
    %12 = vector.broadcast %1 : vector<1x256xf32> to vector<8x256xf32>
    %13 = vector.broadcast %5 : vector<8x1xf32> to vector<8x256xf32>
    %14 = arith.subf %12, %13 : vector<8x256xf32>
    %15 = vector.broadcast %3 : vector<1x256xf32> to vector<8x256xf32>
    %16 = vector.broadcast %7 : vector<8x1xf32> to vector<8x256xf32>
    %17 = arith.subf %15, %16 : vector<8x256xf32>
    %18 = arith.mulf %14, %14 : vector<8x256xf32>
    %19 = arith.mulf %17, %17 : vector<8x256xf32>
    %20 = arith.addf %18, %19 : vector<8x256xf32>
    %21 = vector.broadcast %11 : vector<8x1xf32> to vector<8x256xf32>
    %22 = arith.mulf %20, %21 : vector<8x256xf32>
    %23 = math.exp %22 : vector<8x256xf32>
    %24 = vector.broadcast %9 : vector<8x1xf32> to vector<8x256xf32>
    %25 = arith.mulf %24, %23 : vector<8x256xf32>
    %cst = arith.constant dense<0.000000e+00> : vector<256xf32>
    %26 = vector.multi_reduction <add>, %25, %cst [0] : vector<8x256xf32> to vector<256xf32>
    %27 = vector.shape_cast %26 : vector<256xf32> to vector<1x256xf32>
    %c0_18 = arith.constant 0 : index
    %c0_19 = arith.constant 0 : index
    %c0_20 = arith.constant 0 : index
    %28 = vector.load %arg4[%c0_18, %c0_19, %c0_20] : memref<1x1x256xf32, #tpu.memory_space<vmem>>, vector<1x1x256xf32>
    %29 = vector.shape_cast %28 : vector<1x1x256xf32> to vector<1x256xf32>
    %30 = vector.shape_cast %27 : vector<1x256xf32> to vector<1x1x256xf32>
    tpu.vector_store %arg4[%c0_18, %c0_19, %c0_20], %30 {strides = array<i32>} : memref<1x1x256xf32, #tpu.memory_space<vmem>>, vector<1x1x256xf32>,
    return
  }
  func.func @transform_0(%arg0: i32, %arg1: i32) -> (i32, i32, i32) {
    %c0_i32 = arith.constant 0 : i32
    %c0_i32_0 = arith.constant 0 : i32
    return %arg0, %c0_i32, %arg1 : i32, i32, i32
  }
  func.func @transform_1(%arg0: i32, %arg1: i32) -> (i32, i32, i32, i32) {
    %c0_i32 = arith.constant 0 : i32
    %c0_i32_0 = arith.constant 0 : i32
    %c0_i32_1 = arith.constant 0 : i32
    %c0_i32_2 = arith.constant 0 : i32
    return %arg0, %c0_i32, %c0_i32_0, %c0_i32_1 : i32, i32, i32, i32
  }
  func.func @transform_2(%arg0: i32, %arg1: i32) -> (i32, i32, i32) {
    %c0_i32 = arith.constant 0 : i32
    %c0_i32_0 = arith.constant 0 : i32
    return %arg0, %c0_i32, %arg1 : i32, i32, i32
  }
}

</mosaic_0001>

<llo_original>
// kernel: squeeze.9
$region0: #{squeeze.9}
  %s0 = inlined_call_operand.vmem [shape: f32[2,256], index: 0, kind: input, shape index: {}]
  %s1 = inlined_call_operand.hbm [shape: f32[2,16,16,1], index: 1, kind: output, shape index: {}]
  $region1: #{squeeze.9} parent=0
    #allocation0 [shape = 'u8[16384]{0}', space=vmem, size = 0x4000, scoped, tag = 'operand span for operand 1']
    #allocation1 [shape = 's32[1]{0}', space=sflag, size = 0x4, scoped, tag = 'scoped memory for squeeze.9']
    #allocation2 [shape = 'u8[8192]{0}', space=vmem, size = 0x2000, scoped, tag = 'scoped mem for input reshape']
    %2 = vsyncpa [#allocation1], 0
    %s4 = ssub.s32 4, 1
    %s5 = scalar_lea.vmem %s0, 2
    %v6 = vld [vmem:[%s5] sm:%s4]
    %s7 = scalar_lea.vmem [#allocation2], 8
    %8 = vst [vmem:[%s7] sm:%s4] %v6
    %v9 = vld [vmem:[%s0] sm:%s4]
    %10 = vst [vmem:[#allocation2] sm:%s4] %v9
    %v11 = vld [vmem:[#allocation2] sm:$0x3]
    %vm12 = vcmask 130048
    %13 = vst.msk [vmem:[#allocation0] ss:$16 sm:$0x3] %vm12, %v11
    %s14 = scalar_lea.vmem [#allocation2], 8
    %v15 = vld [vmem:[%s14] sm:$0x3]
    %vm16 = vcmask 130048
    %s17 = scalar_lea.vmem [#allocation0], 8
    %18 = vst.msk [vmem:[%s17] ss:$16 sm:$0x3] %vm16, %v15
    %v19 = vld.sshfl [vmem:[#allocation2] sm:$0xff pattern:$0x99999180]
    %20 = vrot.lane.b32.xlu0 %v19, 112
    %v21 = vpop.permute.xlu0 %20
    %vm22 = vcmask 130048
    %s23 = scalar_lea.vmem [#allocation0], 1
    %24 = vst.msk [vmem:[%s23] ss:$8 sm:$0xf] %vm22, %v21
    %v25 = vld.sshfl [vmem:[#allocation2] sm:$0xff pattern:$0x99999180]
    %26 = vrot.lane.b32.xlu0 %v25, 96
    %v27 = vpop.permute.xlu0 %26
    %vm28 = vcmask 130048
    %s29 = scalar_lea.vmem [#allocation0], 2
    %30 = vst.msk [vmem:[%s29] ss:$8 sm:$0xf] %vm28, %v27
    %v31 = vld.sshfl [vmem:[#allocation2] sm:$0xff pattern:$0x99999180]
    %32 = vrot.lane.b32.xlu0 %v31, 80
    %v33 = vpop.permute.xlu0 %32
    %vm34 = vcmask 130048
    %s35 = scalar_lea.vmem [#allocation0], 3
    %36 = vst.msk [vmem:[%s35] ss:$8 sm:$0xf] %vm34, %v33
    %v37 = vld.sshfl [vmem:[#allocation2] sm:$0xff pattern:$0x99999180]
    %38 = vrot.lane.b32.xlu0 %v37, 64
    %v39 = vpop.permute.xlu0 %38
    %vm40 = vcmask 130048
    %s41 = scalar_lea.vmem [#allocation0], 4
    %42 = vst.msk [vmem:[%s41] ss:$8 sm:$0xf] %vm40, %v39
    %v43 = vld.sshfl [vmem:[#allocation2] sm:$0xff pattern:$0x99999180]
    %44 = vrot.lane.b32.xlu0 %v43, 48
    %v45 = vpop.permute.xlu0 %44
    %vm46 = vcmask 130048
    %s47 = scalar_lea.vmem [#allocation0], 5
    %48 = vst.msk [vmem:[%s47] ss:$8 sm:$0xf] %vm46, %v45
    %v49 = vld.sshfl [vmem:[#allocation2] sm:$0xff pattern:$0x99999180]
    %50 = vrot.lane.b32.xlu0 %v49, 32
    %v51 = vpop.permute.xlu0 %50
    %vm52 = vcmask 130048
    %s53 = scalar_lea.vmem [#allocation0], 6
    %54 = vst.msk [vmem:[%s53] ss:$8 sm:$0xf] %vm52, %v51
    %v55 = vld.sshfl [vmem:[#allocation2] sm:$0xff pattern:$0x99999180]
    %56 = vrot.lane.b32.xlu0 %v55, 16
    %v57 = vpop.permute.xlu0 %56
    %vm58 = vcmask 130048
    %s59 = scalar_lea.vmem [#allocation0], 7
    %60 = vst.msk [vmem:[%s59] ss:$8 sm:$0xf] %vm58, %v57
    %62 = vsyncadd [#allocation1], 0
    %s64 = sshll.u32 [#allocation0], 4
    %s65 = int_to_ptr.vmem [resolvable:$true] %s64
    %s66 = sshll.u32 %s1, 4
    %s67 = int_to_ptr.hbm [resolvable:$true] %s66
    %69 = dma.vmem_to_hbm [thread:$0]  %s65, 512, %s67, [#allocation1]
    %71 = dma.done [#allocation1], 512
    %72 = vsyncpa [#allocation1], 1

// kernel: _gaussian_falloff_kernel_vorticity.1
$region0: #{_gaussian_falloff_kernel_vorticity.1}
  #allocation0 [shape = 'u32[]', space=smem, size = 0x4, offset = 0x4, fixed_abs, tag = 'smem constant byte address 0x4 - core index']
  #allocation1 [shape = 'u32[72,128]{1,0:T(1,128)}', space=vmem, size = 0x9000, scoped, tag = 'internal scratch']
  %s0 = inlined_call_operand.vmem [shape: f32[2,2,256], index: 0, kind: input, shape index: {}]
  %s1 = inlined_call_operand.vmem [shape: f32[2,4,8,1], index: 1, kind: input, shape index: {}]
  %s2 = inlined_call_operand.vmem [shape: f32[2,1,256], index: 2, kind: output, shape index: {}]
  %s3 = sld [smem:[#allocation0]]
  $region41: #{_gaussian_falloff_kernel_vorticity.1} parent=0
    _
  %s5 = ssub.s32 1, %s3
  %s6 = scalar_select 0, %s5, %s3
  loop: start=0, step=1, limit=4
  $region2: #{_gaussian_falloff_kernel_vorticity.1} parent=0 // loop_pre_header
    _
  $region3: #{_gaussian_falloff_kernel_vorticity.1} parent=0 // loop_header
    %s8 = sphi 0, %s12
    %p9 = scmp.ge.s32.totalorder %s8, 4
    %s15 = sphi 0, %s27
    %s16 = sphi 0, %s23
    %s17 = sphi 0, %s15
    %s18 = sphi 0, %s16
    %s19 = sphi 0, %s17
    %s20 = sphi 0, %s18
    %s32 = sphi 0, %s34
    %s35 = sphi 0, %s32
    %s36 = sphi 0, %s35
    %s52 = sphi 0, %s36
    %s58 = sphi 0, %s60
    %s61 = sphi 0, %s58
    %s62 = sphi 0, %s61
    %s78 = sphi 0, %s62
    %s86 = sphi 0, %s88
    %s89 = sphi 0, %s86
    %s90 = sphi 0, %s89
    %s106 = sphi 0, %s90
  $region4: #{_gaussian_falloff_kernel_vorticity.1} parent=0 // loop_header_branch
    %11 = sbr.rel (%p9) target = $region8
  $region5: #{_gaussian_falloff_kernel_vorticity.1} parent=0 // loop_body
    %s13 = ssub.s32 %s8, 1
    %s14 = ssub.s32 %s8, 2
    %s21 = sadd.s32 1, %s16
    %p22 = scmp.ge.s32.totalorder %s21, 1
    %s23 = scalar_select %p22, 0, %s21
    %s24 = sadd.s32 1, %s15
    %s25 = scalar_select %p22, %s24, %s15
    %p26 = scmp.ge.s32.totalorder %s25, 2
    %s27 = scalar_select %p26, 0, %s25
    %s28 = ssub.s32 %s15, %s27
    %s29 = ssub.s32 %s16, %s23
    %s30 = sor.u32 %s28, %s29
    %p31 = scmp.eq.s32.totalorder %s30, 0
    %s33 = sadd.s32 %s32, 1
    %s34 = scalar_select %p31, %s32, %s33
    %p37 = pneg %p31
    %p38 = scmp.eq.s32.totalorder %s8, 1
    %p39 = por %p37, %p38
    %p40 = scmp.ne.s32.totalorder %s32, %s35
    %p41 = scmp.eq.s32.totalorder %s8, 0
    %p42 = por %p40, %p41
    %p43 = scmp.ne.s32.totalorder %s32, %s35
    %p44 = scmp.eq.s32.totalorder %s13, 1
    %p45 = por %p43, %p44
    %p46 = scmp.ne.s32.totalorder %s35, %s36
    %p47 = scmp.eq.s32.totalorder %s13, 0
    %p48 = por %p46, %p47
    %p49 = scmp.ne.s32.totalorder %s35, %s36
    %p50 = scmp.eq.s32.totalorder %s14, 1
    %p51 = por %p49, %p50
    %p53 = scmp.ne.s32.totalorder %s36, %s52
    %p54 = scmp.eq.s32.totalorder %s14, 0
    %p55 = por %p53, %p54
    %s56 = ssub.s32 %s15, %s27
    %p57 = scmp.eq.s32.totalorder %s56, 0
    %s59 = sadd.s32 %s58, 1
    %s60 = scalar_select %p57, %s58, %s59
    %p63 = pneg %p57
    %p64 = scmp.eq.s32.totalorder %s8, 1
    %p65 = por %p63, %p64
    %p66 = scmp.ne.s32.totalorder %s58, %s61
    %p67 = scmp.eq.s32.totalorder %s8, 0
    %p68 = por %p66, %p67
    %p69 = scmp.ne.s32.totalorder %s58, %s61
    %p70 = scmp.eq.s32.totalorder %s13, 1
    %p71 = por %p69, %p70
    %p72 = scmp.ne.s32.totalorder %s61, %s62
    %p73 = scmp.eq.s32.totalorder %s13, 0
    %p74 = por %p72, %p73
    %p75 = scmp.ne.s32.totalorder %s61, %s62
    %p76 = scmp.eq.s32.totalorder %s14, 1
    %p77 = por %p75, %p76
    %p79 = scmp.ne.s32.totalorder %s62, %s78
    %p80 = scmp.eq.s32.totalorder %s14, 0
    %p81 = por %p79, %p80
    %s82 = ssub.s32 %s15, %s27
    %s83 = ssub.s32 %s16, %s23
    %s84 = sor.u32 %s82, %s83
    %p85 = scmp.eq.s32.totalorder %s84, 0
    %s87 = sadd.s32 %s86, 1
    %s88 = scalar_select %p85, %s86, %s87
    %p91 = pneg %p85
    %p92 = scmp.eq.s32.totalorder %s8, 1
    %p93 = por %p91, %p92
    %p94 = scmp.ne.s32.totalorder %s86, %s89
    %p95 = scmp.eq.s32.totalorder %s8, 0
    %p96 = por %p94, %p95
    %p97 = scmp.ne.s32.totalorder %s86, %s89
    %p98 = scmp.eq.s32.totalorder %s13, 1
    %p99 = por %p97, %p98
    %p100 = scmp.ne.s32.totalorder %s89, %s90
    %p101 = scmp.eq.s32.totalorder %s13, 0
    %p102 = por %p100, %p101
    %p103 = scmp.ne.s32.totalorder %s89, %s90
    %p104 = scmp.eq.s32.totalorder %s14, 1
    %p105 = por %p103, %p104
    %p107 = scmp.ne.s32.totalorder %s90, %s106
    %p108 = scmp.eq.s32.totalorder %s14, 0
    %p109 = por %p107, %p108
    %p110 = scmp.le.s32.totalorder 1, %s8
    %p111 = scmp.lt.s32.totalorder %s8, 3
    %p112 = pnand %p110, %p111
    %p113 = pneg %p112
    // Predicated region
    $region9: #{_gaussian_falloff_kernel_vorticity.1} parent=5 // pred_check
      _
    $region10: #{_gaussian_falloff_kernel_vorticity.1} parent=5 // pred_check_branch
      %115 = sbr.rel (%p112) target = $region12
    $region11: #{_gaussian_falloff_kernel_vorticity.1} parent=5 // pred_region
      %s116 = ssub.s32 %s8, 1
    $region12: #{_gaussian_falloff_kernel_vorticity.1} parent=5 // pred_fallthru
      _
    %p117 = scmp.lt.s32.totalorder %s8, 2
    // Predicated region
    $region13: #{_gaussian_falloff_kernel_vorticity.1} parent=5 // pred_check
      %p118 = pneg %p117
    $region14: #{_gaussian_falloff_kernel_vorticity.1} parent=5 // pred_check_branch
      %120 = sbr.rel (%p118) target = $region16
    $region15: #{_gaussian_falloff_kernel_vorticity.1} parent=5 // pred_region
      // Predicated region
      $region17: #{_gaussian_falloff_kernel_vorticity.1} parent=15 // pred_check
        %p121 = pneg %p42
      $region18: #{_gaussian_falloff_kernel_vorticity.1} parent=15 // pred_check_branch
        %123 = sbr.rel (%p121) target = $region20
      $region19: #{_gaussian_falloff_kernel_vorticity.1} parent=15 // pred_region
        %s124 = smul.u32 2, %s16
        %p125 = scmp.lt.s32.totalorder %s15, 1
        %s126 = scalar_select %p125, %s15, 1
        %p127 = scmp.lt.s32.totalorder %s124, 1
        %s128 = scalar_select %p127, %s124, 1
        %s129 = smul.addr %s126, 2
        %s130 = sadd.s32 %s128, %s129
        %s131 = smul.addr %s130, 2
        %s132 = scalar_lea.vmem %s0, %s131
        %s133 = smul.u32 2, %s16
      $region20: #{_gaussian_falloff_kernel_vorticity.1} parent=15 // pred_fallthru
        _
      // Predicated region
      $region21: #{_gaussian_falloff_kernel_vorticity.1} parent=15 // pred_check
        %p134 = pneg %p68
      $region22: #{_gaussian_falloff_kernel_vorticity.1} parent=15 // pred_check_branch
        %136 = sbr.rel (%p134) target = $region24
      $region23: #{_gaussian_falloff_kernel_vorticity.1} parent=15 // pred_region
        %p137 = scmp.lt.s32.totalorder %s15, 1
        %s138 = scalar_select %p137, %s15, 1
        %s139 = smul.addr %s138, 4
        %s140 = smul.addr %s139, 8
        %s141 = scalar_lea.vmem %s1, %s140
      $region24: #{_gaussian_falloff_kernel_vorticity.1} parent=15 // pred_fallthru
        _
    $region16: #{_gaussian_falloff_kernel_vorticity.1} parent=5 // pred_fallthru
      _
    %p142 = scmp.le.s32.totalorder 1, %s8
    %p143 = scmp.lt.s32.totalorder %s8, 3
    %p144 = pnand %p142, %p143
    %p145 = pneg %p144
    // Predicated region
    $region25: #{_gaussian_falloff_kernel_vorticity.1} parent=5 // pred_check
      _
    $region26: #{_gaussian_falloff_kernel_vorticity.1} parent=5 // pred_check_branch
      %147 = sbr.rel (%p144) target = $region28
    $region27: #{_gaussian_falloff_kernel_vorticity.1} parent=5 // pred_region
      %s148 = ssub.s32 %s8, 1
      %s149 = smul.u32 2, %s18
      %p150 = scmp.lt.s32.totalorder %s17, 1
      %s151 = scalar_select %p150, %s17, 1
      %p152 = scmp.lt.s32.totalorder %s149, 1
      %s153 = scalar_select %p152, %s149, 1
      %s154 = smul.addr %s151, 2
      %s155 = sadd.s32 %s153, %s154
      %s156 = smul.addr %s155, 2
      %s157 = scalar_lea.vmem %s0, %s156
      %p158 = pneg %p48
      %p159 = pneg %p45
      %p160 = scmp.lt.s32.totalorder %s17, 1
      %s161 = scalar_select %p160, %s17, 1
      %s162 = smul.addr %s161, 4
      %s163 = smul.addr %s162, 8
      %s164 = scalar_lea.vmem %s1, %s163
      %p165 = pneg %p74
      %p166 = pneg %p71
      %p167 = pneg %p102
      %p168 = pneg %p99
      %s169 = smul.u32 2, %s18
      %p170 = scmp.lt.s32.totalorder %s17, 1
      %s171 = scalar_select %p170, %s17, 1
      %p172 = scmp.lt.s32.totalorder %s169, 1
      %s173 = scalar_select %p172, %s169, 1
      %s174 = smul.addr %s171, 2
      %s175 = sadd.s32 %s173, %s174
      %s176 = scalar_lea.vmem %s2, %s175
      %s177 = smul.u32 2, %s18
      %p178 = scmp.lt.s32.totalorder %s17, 1
      %s179 = scalar_select %p178, %s17, 1
      %p180 = scmp.lt.s32.totalorder %s177, 1
      %s181 = scalar_select %p180, %s177, 1
      %s182 = smul.addr %s179, 2
      %s183 = sadd.s32 %s181, %s182
      %s184 = smul.addr %s183, 2
      %s185 = scalar_lea.vmem %s0, %s184
      %s186 = smul.u32 2, %s18
      %p187 = scmp.lt.s32.totalorder %s17, 1
      %s188 = scalar_select %p187, %s17, 1
      %s189 = smul.addr %s188, 4
      %s190 = smul.addr %s189, 8
      %s191 = scalar_lea.vmem %s1, %s190
      %s192 = smul.u32 2, %s18
      %p193 = scmp.lt.s32.totalorder %s17, 1
      %s194 = scalar_select %p193, %s17, 1
      %p195 = scmp.lt.s32.totalorder %s192, 1
      %s196 = scalar_select %p195, %s192, 1
      %s197 = smul.addr %s194, 2
      %s198 = sadd.s32 %s196, %s197
      %s199 = scalar_lea.vmem %s2, %s198
      %s200 = smul.u32 2, %s18
      %v201 = vld [vmem:[%s185] ss:$2 sm:$0x3]
      %s202 = scalar_lea.vmem %s185, 1
      %v203 = vld [vmem:[%s202] ss:$2 sm:$0x3]
      %v204 = vld [vmem:[%s191] sm:$0xff]
      %s205 = scalar_lea.vmem %s191, 8
      %v206 = vld [vmem:[%s205] sm:$0xff]
      %s207 = scalar_lea.vmem %s191, 16
      %v208 = vld [vmem:[%s207] sm:$0xff]
      %s209 = scalar_lea.vmem %s191, 24
      %v210 = vld [vmem:[%s209] sm:$0xff]
      %v212 = vperm.slane %v201, 0
      %v213 = vperm.slane %v201, 1
      %217 = vset.pattern.permute.xlu0 0
      %218 = vperm.xlu0 %217, %v204
      %v219 = vpop.permute.xlu0 %218
      %v221 = vsub.f32 %v212, %v219
      %v222 = vsub.f32 %v213, %v219
      %v224 = vperm.slane %v203, 0
      %v225 = vperm.slane %v203, 1
      %229 = vset.pattern.permute.xlu0 0
      %230 = vperm.xlu0 %229, %v206
      %v231 = vpop.permute.xlu0 %230
      %v233 = vsub.f32 %v224, %v231
      %v234 = vsub.f32 %v225, %v231
      %v235 = vmul.f32 %v221, %v221
      %v236 = vmul.f32 %v222, %v222
      %v237 = vmul.f32 %v233, %v233
      %v238 = vmul.f32 %v234, %v234
      %v239 = vadd.f32 %v235, %v237
      %v240 = vadd.f32 %v236, %v238
      %242 = vset.pattern.permute.xlu0 0
      %243 = vperm.xlu0 %242, %v210
      %v244 = vpop.permute.xlu0 %243
      %v246 = vmul.f32 %v239, %v244
      %v247 = vmul.f32 %v240, %v244
      %v248 = vmul.f32 %v246, 1.442695
      %v249 = vpow.pop %v248
      %v250 = vmul.f32 %v247, 1.442695
      %v251 = vpow.pop %v250
      %253 = vset.pattern.permute.xlu0 0
      %254 = vperm.xlu0 %253, %v208
      %v255 = vpop.permute.xlu0 %254
      %v257 = vmul.f32 %v255, %v249
      %v258 = vmul.f32 %v255, %v251
      %v259 = vrot.slane %v257, 4
      %v260 = vadd.f32 %v257, %v259
      %v261 = vrot.slane %v260, 2
      %v262 = vadd.f32 %v260, %v261
      %v263 = vrot.slane %v262, 1
      %v264 = vadd.f32 %v262, %v263
      %v265 = vrot.slane %v258, 4
      %v266 = vadd.f32 %v258, %v265
      %v267 = vrot.slane %v266, 2
      %v268 = vadd.f32 %v266, %v267
      %v269 = vrot.slane %v268, 1
      %v270 = vadd.f32 %v268, %v269
      %v273 = vrot.slane %v270, 7
      %vm274 = vcmask 1040384
      %v275 = vsel %vm274, %v264, %v273
      %v277 = vlaneseq
      %vm278 = vcmp.ge.s32.totalorder %v277, 0
      %vm279 = vcmp.lt.s32.totalorder %v277, 256
      %vm280 = vmand %vm278, %vm279
      %281 = vst.msk [vmem:[%s199] sm:$0x3] %vm280, %v275
      %s282 = smul.u32 2, %s18
      %p283 = scmp.lt.s32.totalorder %s17, 1
      %s284 = scalar_select %p283, %s17, 1
      %p285 = scmp.lt.s32.totalorder %s282, 1
      %s286 = scalar_select %p285, %s282, 1
      %s287 = smul.addr %s284, 2
      %s288 = sadd.s32 %s286, %s287
      %s289 = scalar_lea.vmem %s2, %s288
      // Predicated region
      $region29: #{_gaussian_falloff_kernel_vorticity.1} parent=27 // pred_check
        %p290 = pneg %p99
      $region30: #{_gaussian_falloff_kernel_vorticity.1} parent=27 // pred_check_branch
        %292 = sbr.rel (%p290) target = $region32
      $region31: #{_gaussian_falloff_kernel_vorticity.1} parent=27 // pred_region
        %s293 = smul.u32 2, %s18
      $region32: #{_gaussian_falloff_kernel_vorticity.1} parent=27 // pred_fallthru
        _
    $region28: #{_gaussian_falloff_kernel_vorticity.1} parent=5 // pred_fallthru
      _
    %p294 = scmp.le.s32.totalorder 2, %s8
    // Predicated region
    $region33: #{_gaussian_falloff_kernel_vorticity.1} parent=5 // pred_check
      %p295 = pneg %p294
    $region34: #{_gaussian_falloff_kernel_vorticity.1} parent=5 // pred_check_branch
      %297 = sbr.rel (%p295) target = $region36
    $region35: #{_gaussian_falloff_kernel_vorticity.1} parent=5 // pred_region
      %s298 = ssub.s32 %s8, 2
      // Predicated region
      $region37: #{_gaussian_falloff_kernel_vorticity.1} parent=35 // pred_check
        %p299 = pneg %p105
      $region38: #{_gaussian_falloff_kernel_vorticity.1} parent=35 // pred_check_branch
        %301 = sbr.rel (%p299) target = $region40
      $region39: #{_gaussian_falloff_kernel_vorticity.1} parent=35 // pred_region
        %s302 = smul.u32 2, %s20
        %p303 = scmp.lt.s32.totalorder %s19, 1
        %s304 = scalar_select %p303, %s19, 1
        %p305 = scmp.lt.s32.totalorder %s302, 1
        %s306 = scalar_select %p305, %s302, 1
        %s307 = smul.addr %s304, 2
        %s308 = sadd.s32 %s306, %s307
        %s309 = scalar_lea.vmem %s2, %s308
      $region40: #{_gaussian_falloff_kernel_vorticity.1} parent=35 // pred_fallthru
        _
    $region36: #{_gaussian_falloff_kernel_vorticity.1} parent=5 // pred_fallthru
      _
  $region6: #{_gaussian_falloff_kernel_vorticity.1} parent=0 // loop_footer
    %s12 = sadd.s32 1, %s8
  $region7: #{_gaussian_falloff_kernel_vorticity.1} parent=0 // loop_footer_branch
    %7 = sbr.rel target = $region3
  $region8: #{_gaussian_falloff_kernel_vorticity.1} parent=0 // loop_exit
    _

</llo_original>
